<compile_context>
chip_gen: v7x
topology: tpu7x:2x2x1
jax: 0.10.0
libtpu: 0.0.40
codegen_flags: <defaults>
</compile_context>

<pallas_src>
import jax
import jax.numpy as jnp
from jax.experimental import pallas as pl
from jax.experimental.pallas import tpu as pltpu


def _round_up(x, m):
    return (x + m - 1) // m * m


def _vmem_capacity_bytes():
    try:
        return int(pltpu.get_tpu_info().vmem_capacity_bytes)
    except Exception:
        return 64 << 20  # conservative fallback (v7x per-TC VMEM)


# ----------------------------- kernels --------------------------------------


def _ffn_resident_kernel(x_ref, w1_ref, b1_ref, w2_ref, b2_ref, o_ref):
    """Weights fully VMEM-resident (constant index maps): one pass per M tile."""
    hid = jnp.dot(x_ref[...], w1_ref[...], preferred_element_type=jnp.float32)
    hid = jnp.maximum(hid + b1_ref[...].astype(jnp.float32), 0.0)
    out = jnp.dot(hid.astype(w2_ref.dtype), w2_ref[...],
                  preferred_element_type=jnp.float32)
    o_ref[...] = (out + b2_ref[...].astype(jnp.float32)).astype(o_ref.dtype)


def _ffn_streamed_f32_kernel(x_ref, w1_ref, b1_ref, w2_ref, b2_ref, o_ref):
    """Hidden dim streamed in blocks; the f32 output tile doubles as accumulator."""
    h_idx = pl.program_id(1)

    hid = jnp.dot(x_ref[...], w1_ref[...], preferred_element_type=jnp.float32)
    hid = jnp.maximum(hid + b1_ref[...].astype(jnp.float32), 0.0)
    part = jnp.dot(hid.astype(w2_ref.dtype), w2_ref[...],
                   preferred_element_type=jnp.float32)

    @pl.when(h_idx == 0)
    def _():
        o_ref[...] = part                # first block: plain store, no zero-init

    @pl.when(h_idx > 0)
    def _():
        o_ref[...] += part

    @pl.when(h_idx == pl.num_programs(1) - 1)
    def _():
        o_ref[...] += b2_ref[...].astype(jnp.float32)   # bias hoisted to finalize


def _ffn_streamed_acc_kernel(x_ref, w1_ref, b1_ref, w2_ref, b2_ref, o_ref, acc_ref):
    """Hidden dim streamed; separate f32 accumulator for narrow output dtypes."""
    h_idx = pl.program_id(1)

    hid = jnp.dot(x_ref[...], w1_ref[...], preferred_element_type=jnp.float32)
    hid = jnp.maximum(hid + b1_ref[...].astype(jnp.float32), 0.0)
    part = jnp.dot(hid.astype(w2_ref.dtype), w2_ref[...],
                   preferred_element_type=jnp.float32)

    @pl.when(h_idx == 0)
    def _():
        acc_ref[...] = part

    @pl.when(h_idx > 0)
    def _():
        acc_ref[...] += part

    @pl.when(h_idx == pl.num_programs(1) - 1)
    def _():
        o_ref[...] = (acc_ref[...] + b2_ref[...].astype(jnp.float32)).astype(o_ref.dtype)


# ----------------------------- wrapper ---------------------------------------


@jax.jit
def feed_forward_block(x, w1, b1, w2, b2):
    """x: [batch, seq, dim_ff]; w*: [dim_ff, dim_ff] (in,out layout); b*: [dim_ff]."""
    batch, seq, d = x.shape
    m = batch * seq
    itemsize = jnp.dtype(x.dtype).itemsize
    out_is_f32 = x.dtype == jnp.float32

    d_p = _round_up(d, 128)  # lane-dense feature dim

    # --- per-generation VMEM budget (static under jit) ----------------------
    vmem_cap = _vmem_capacity_bytes()
    vmem_ceiling = int(vmem_cap * 0.85)     # never request full physical VMEM
    budget = max(vmem_ceiling - (4 << 20), 8 << 20)  # headroom for Mosaic scratch

    # --- block_m cap: pad cheaply, and keep >=2 M tiles for v7x's 2 TCs -----
    m_block_cap = _round_up(m, 8)
    if m > 256:
        m_block_cap = min(m_block_cap, _round_up((m + 1) // 2, 8))

    def resident_bytes(bm):
        return (2 * bm * d_p * itemsize          # x tile (double-buffered)
                + 2 * bm * d_p * itemsize        # out tile
                + 2 * 2 * d_p * d_p * itemsize   # W1 + W2 resident (2 bufs each)
                + 2 * 2 * 8 * d_p * itemsize     # biases (sublane-padded)
                + 2 * bm * d_p * 4)              # hid / pre-cast f32 staging

    def streamed_bytes(bm, bh):
        acc = 0 if out_is_f32 else bm * d_p * 4
        return (2 * bm * d_p * itemsize          # x tile
                + 2 * bm * d_p * itemsize        # out tile
                + 2 * d_p * bh * itemsize        # W1 column block
                + 2 * bh * d_p * itemsize        # W2 row block
                + 2 * 8 * (bh + d_p) * itemsize  # biases
                + acc                            # f32 accumulator scratch
                + bm * bh * 4                    # hid f32 staging
                + bm * d_p * 4)                  # partial-product f32 staging

    bm_candidates = sorted(
        {min(c, m_block_cap) for c in (1024, 512, 384, 256, 128, 64, 32, 16, 8)},
        reverse=True,
    )

    # --- weight-resident fast path vs streamed-hidden path ------------------
    use_resident = resident_bytes(min(256, m_block_cap)) <= budget
    if use_resident:
        block_m = min(256, m_block_cap)
        for bm in bm_candidates:                 # grow block_m while it fits
            if bm > block_m and resident_bytes(bm) <= budget:
                block_m = bm
                break
        block_h = d_p
    else:
        bh_candidates = [bh for bh in (1024, 512, 256, 128)
                         if bh <= d_p and d_p % bh == 0]
        block_m = block_h = None
        for bm in bm_candidates:
            for bh in bh_candidates:
                if streamed_bytes(bm, bh) <= budget:
                    block_m, block_h = bm, bh
                    break
            if block_m is not None:
                break
        if block_m is None:
            # TODO(synk): for extremely large D add an output-column grid axis
            # instead of collapsing block_m; this fallback keeps correctness.
            block_m, block_h = min(64, m_block_cap), 128

    m_p = _round_up(m, block_m)
    m_tiles = m_p // block_m

    # --- pad operands to lane/sublane-friendly shapes ------------------------
    x2d = jnp.pad(x.reshape(m, d), ((0, m_p - m), (0, d_p - d)))
    w1p = jnp.pad(w1, ((0, d_p - d), (0, d_p - d)))
    w2p = jnp.pad(w2, ((0, d_p - d), (0, d_p - d)))
    b1p = jnp.pad(b1, (0, d_p - d)).reshape(1, d_p)
    b2p = jnp.pad(b2, (0, d_p - d)).reshape(1, d_p)

    # --- grid / specs / kernel -----------------------------------------------
    if use_resident:
        grid = (m_tiles,)
        in_specs = [
            pl.BlockSpec((block_m, d_p), lambda i: (i, 0)),    # x tile
            pl.BlockSpec((d_p, d_p), lambda i: (0, 0)),        # W1 (DMA'd once)
            pl.BlockSpec((1, d_p), lambda i: (0, 0)),          # b1
            pl.BlockSpec((d_p, d_p), lambda i: (0, 0)),        # W2 (DMA'd once)
            pl.BlockSpec((1, d_p), lambda i: (0, 0)),          # b2
        ]
        out_specs = pl.BlockSpec((block_m, d_p), lambda i: (i, 0))
        scratch_shapes = ()
        kernel = _ffn_resident_kernel
        dim_sem = ("parallel",)
        buf_bytes = resident_bytes(block_m)
        weight_bytes = 2 * d_p * d_p * itemsize
    else:
        grid = (m_tiles, d_p // block_h)         # hidden (reduction) axis last
        in_specs = [
            pl.BlockSpec((block_m, d_p), lambda i, h: (i, 0)),   # x tile
            pl.BlockSpec((d_p, block_h), lambda i, h: (0, h)),   # W1 col block
            pl.BlockSpec((1, block_h), lambda i, h: (0, h)),     # b1 block
            pl.BlockSpec((block_h, d_p), lambda i, h: (h, 0)),   # W2 row block
            pl.BlockSpec((1, d_p), lambda i, h: (0, 0)),         # b2
        ]
        out_specs = pl.BlockSpec((block_m, d_p), lambda i, h: (i, 0))
        if out_is_f32:
            scratch_shapes = ()
            kernel = _ffn_streamed_f32_kernel
        else:
            scratch_shapes = (pltpu.VMEM((block_m, d_p), jnp.float32),)
            kernel = _ffn_streamed_acc_kernel
        dim_sem = ("parallel", "arbitrary")
        buf_bytes = streamed_bytes(block_m, block_h)
        weight_bytes = m_tiles * 2 * d_p * d_p * itemsize   # weights re-streamed

    vmem_limit = max(min(int(buf_bytes) + (4 << 20), vmem_ceiling), 16 << 20)
    vmem_limit = min(vmem_limit, int(vmem_cap))

    cost = pl.CostEstimate(
        flops=4 * m_p * d_p * d_p,  # two D x D matmuls over M rows
        transcendentals=0,
        bytes_accessed=weight_bytes + 2 * m_p * d_p * itemsize + 4 * d_p * itemsize,
    )

    out2d = pl.pallas_call(
        kernel,
        out_shape=jax.ShapeDtypeStruct((m_p, d_p), x.dtype),
        grid_spec=pltpu.PrefetchScalarGridSpec(
            num_scalar_prefetch=0,
            grid=grid,
            in_specs=in_specs,
            out_specs=out_specs,
            scratch_shapes=scratch_shapes,
        ),
        compiler_params=pltpu.CompilerParams(
            dimension_semantics=dim_sem,
            vmem_limit_bytes=vmem_limit,
        ),
        cost_estimate=cost,
    )(x2d, w1p, b1p, w2p, b2p)

    return out2d[:m, :d].reshape(batch, seq, d)


def init_params(key, dim_ff, dtype=jnp.float32):
    # Mimic PyTorch nn.Linear default init: U(-1/sqrt(in), 1/sqrt(in)).
    k1, k2, k3, k4 = jax.random.split(key, 4)
    bound = 1.0 / (dim_ff ** 0.5)
    # Stored as [in_features, out_features] (transpose of torch's [out, in]).
    w1 = jax.random.uniform(k1, (dim_ff, dim_ff), dtype, -bound, bound)
    b1 = jax.random.uniform(k2, (dim_ff,), dtype, -bound, bound)
    w2 = jax.random.uniform(k3, (dim_ff, dim_ff), dtype, -bound, bound)
    b2 = jax.random.uniform(k4, (dim_ff,), dtype, -bound, bound)
    return w1, b1, w2, b2


if __name__ == "__main__":
    key = jax.random.PRNGKey(0)
    kx, kp = jax.random.split(key)

    batch, seq, dim_ff = 2, 8, 32
    x = jax.random.normal(kx, (batch, seq, dim_ff), dtype=jnp.float32)
    w1, b1, w2, b2 = init_params(kp, dim_ff)

    out = feed_forward_block(x, w1, b1, w2, b2)
    out = jax.block_until_ready(out)

    # Pure-JAX reference check of the same semantics.
    ref = jnp.maximum(x @ w1 + b1, 0.0) @ w2 + b2
    assert out.shape == (batch, seq, dim_ff)
    assert jnp.allclose(out, ref, atol=1e-5, rtol=1e-5)

    print("KERNEL_OK")
</pallas_src>

<mosaic_0001>
module attributes {stable_mosaic.version = 11 : i64} {
  func.func @_ffn_resident_kernel(%arg0: i32, %arg1: memref<16x128xf32, #tpu.memory_space<vmem>>, %arg2: memref<128x128xf32, #tpu.memory_space<vmem>>, %arg3: memref<1x128xf32, #tpu.memory_space<vmem>>, %arg4: memref<128x128xf32, #tpu.memory_space<vmem>>, %arg5: memref<1x128xf32, #tpu.memory_space<vmem>>, %arg6: memref<16x128xf32, #tpu.memory_space<vmem>>) attributes {dimension_semantics = [#tpu.dimension_semantics<parallel>], iteration_bounds = array<i64: 1>, scalar_prefetch = 0 : i64, scratch_operands = 0 : i64, tpu.core_type = #tpu.core_type<tc>, window_params = [{transform_indices = @transform_0, window_bounds = array<i64: 16, 128>}, {pipeline_mode = #tpu.pipeline_mode<synchronous>, transform_indices = @transform_1, window_bounds = array<i64: 128, 128>}, {pipeline_mode = #tpu.pipeline_mode<synchronous>, transform_indices = @transform_2, window_bounds = array<i64: 1, 128>}, {pipeline_mode = #tpu.pipeline_mode<synchronous>, transform_indices = @transform_3, window_bounds = array<i64: 128, 128>}, {pipeline_mode = #tpu.pipeline_mode<synchronous>, transform_indices = @transform_4, window_bounds = array<i64: 1, 128>}, {transform_indices = @transform_5, window_bounds = array<i64: 16, 128>}]} {
    %c0 = arith.constant 0 : index
    %c0_0 = arith.constant 0 : index
    %0 = vector.load %arg1[%c0, %c0_0] : memref<16x128xf32, #tpu.memory_space<vmem>>, vector<16x128xf32>
    %c0_1 = arith.constant 0 : index
    %c0_2 = arith.constant 0 : index
    %1 = vector.load %arg2[%c0_1, %c0_2] : memref<128x128xf32, #tpu.memory_space<vmem>>, vector<128x128xf32>
    %cst = arith.constant dense<0.000000e+00> : vector<16x128xf32>
    %2 = tpu.matmul %0, %1, %cst {dimension_numbers = #tpu.dot_dimension_numbers<[1], [0], [0], [1], [0, 0, 1, 1], [], []>} : vector<16x128xf32>, vector<128x128xf32>, vector<16x128xf32> -> vector<16x128xf32>
    %c0_3 = arith.constant 0 : index
    %c0_4 = arith.constant 0 : index
    %3 = vector.load %arg3[%c0_3, %c0_4] : memref<1x128xf32, #tpu.memory_space<vmem>>, vector<1x128xf32>
    %4 = vector.broadcast %3 : vector<1x128xf32> to vector<16x128xf32>
    %5 = arith.addf %2, %4 : vector<16x128xf32>
    %cst_5 = arith.constant 0.000000e+00 : f32
    %6 = vector.broadcast %cst_5 : f32 to vector<16x128xf32>
    %7 = arith.maximumf %5, %6 : vector<16x128xf32>
    %c0_6 = arith.constant 0 : index
    %c0_7 = arith.constant 0 : index
    %8 = vector.load %arg4[%c0_6, %c0_7] : memref<128x128xf32, #tpu.memory_space<vmem>>, vector<128x128xf32>
    %cst_8 = arith.constant dense<0.000000e+00> : vector<16x128xf32>
    %9 = tpu.matmul %7, %8, %cst_8 {dimension_numbers = #tpu.dot_dimension_numbers<[1], [0], [0], [1], [0, 0, 1, 1], [], []>} : vector<16x128xf32>, vector<128x128xf32>, vector<16x128xf32> -> vector<16x128xf32>
    %c0_9 = arith.constant 0 : index
    %c0_10 = arith.constant 0 : index
    %10 = vector.load %arg5[%c0_9, %c0_10] : memref<1x128xf32, #tpu.memory_space<vmem>>, vector<1x128xf32>
    %11 = vector.broadcast %10 : vector<1x128xf32> to vector<16x128xf32>
    %12 = arith.addf %9, %11 : vector<16x128xf32>
    %c0_11 = arith.constant 0 : index
    %c0_12 = arith.constant 0 : index
    %13 = vector.load %arg6[%c0_11, %c0_12] : memref<16x128xf32, #tpu.memory_space<vmem>>, vector<16x128xf32>
    tpu.vector_store %arg6[%c0_11, %c0_12], %12 {strides = array<i32>} : memref<16x128xf32, #tpu.memory_space<vmem>>, vector<16x128xf32>,
    return
  }
  func.func @transform_0(%arg0: i32) -> (i32, i32) {
    %c0_i32 = arith.constant 0 : i32
    %c0_i32_0 = arith.constant 0 : i32
    return %arg0, %c0_i32 : i32, i32
  }
  func.func @transform_1(%arg0: i32) -> (i32, i32) {
    %c0_i32 = arith.constant 0 : i32
    %c0_i32_0 = arith.constant 0 : i32
    %c0_i32_1 = arith.constant 0 : i32
    return %c0_i32, %c0_i32_0 : i32, i32
  }
  func.func @transform_2(%arg0: i32) -> (i32, i32) {
    %c0_i32 = arith.constant 0 : i32
    %c0_i32_0 = arith.constant 0 : i32
    %c0_i32_1 = arith.constant 0 : i32
    return %c0_i32, %c0_i32_0 : i32, i32
  }
  func.func @transform_3(%arg0: i32) -> (i32, i32) {
    %c0_i32 = arith.constant 0 : i32
    %c0_i32_0 = arith.constant 0 : i32
    %c0_i32_1 = arith.constant 0 : i32
    return %c0_i32, %c0_i32_0 : i32, i32
  }
  func.func @transform_4(%arg0: i32) -> (i32, i32) {
    %c0_i32 = arith.constant 0 : i32
    %c0_i32_0 = arith.constant 0 : i32
    %c0_i32_1 = arith.constant 0 : i32
    return %c0_i32, %c0_i32_0 : i32, i32
  }
  func.func @transform_5(%arg0: i32) -> (i32, i32) {
    %c0_i32 = arith.constant 0 : i32
    %c0_i32_0 = arith.constant 0 : i32
    return %arg0, %c0_i32 : i32, i32
  }
}

</mosaic_0001>

<llo_original>
// kernel: feed_forward_block.1
$region0: #{feed_forward_block.1}
  #allocation0 [shape = 'u32[]', space=smem, size = 0x4, offset = 0x4, fixed_abs, tag = 'smem constant byte address 0x4 - core index']
  #allocation1 [shape = 'u32[144,128]{1,0:T(1,128)}', space=vmem, size = 0x12000, scoped, tag = 'internal scratch']
  %s0 = inlined_call_operand.vmem [shape: f32[16,128], index: 0, kind: input, shape index: {}]
  %s1 = inlined_call_operand.vmem [shape: f32[128,128], index: 1, kind: input, shape index: {}]
  %s2 = inlined_call_operand.vmem [shape: f32[1,128], index: 2, kind: input, shape index: {}]
  %s3 = inlined_call_operand.vmem [shape: f32[128,128], index: 3, kind: input, shape index: {}]
  %s4 = inlined_call_operand.vmem [shape: f32[1,128], index: 4, kind: input, shape index: {}]
  %s5 = inlined_call_operand.vmem [shape: f32[16,128], index: 5, kind: output, shape index: {}]
  %s6 = sld [smem:[#allocation0]]
  $region30: #{feed_forward_block.1} parent=0
    _
  %s8 = ssub.s32 1, %s6
  %s9 = scalar_select 0, %s8, %s6
  // Predicated region
  $region2: #{feed_forward_block.1} parent=0 // pred_check
    _
  $region3: #{feed_forward_block.1} parent=0 // pred_check_branch
    %11 = sbr.rel (0) target = $region5
  $region4: #{feed_forward_block.1} parent=0 // pred_region
    _
  $region5: #{feed_forward_block.1} parent=0 // pred_fallthru
    _
  // Predicated region
  $region6: #{feed_forward_block.1} parent=0 // pred_check
    _
  $region7: #{feed_forward_block.1} parent=0 // pred_check_branch
    %13 = sbr.rel (0) target = $region9
  $region8: #{feed_forward_block.1} parent=0 // pred_region
    _
  $region9: #{feed_forward_block.1} parent=0 // pred_fallthru
    _
  // Predicated region
  $region10: #{feed_forward_block.1} parent=0 // pred_check
    _
  $region11: #{feed_forward_block.1} parent=0 // pred_check_branch
    %15 = sbr.rel (0) target = $region13
  $region12: #{feed_forward_block.1} parent=0 // pred_region
    _
  $region13: #{feed_forward_block.1} parent=0 // pred_fallthru
    _
  // Predicated region
  $region14: #{feed_forward_block.1} parent=0 // pred_check
    _
  $region15: #{feed_forward_block.1} parent=0 // pred_check_branch
    %17 = sbr.rel (0) target = $region17
  $region16: #{feed_forward_block.1} parent=0 // pred_region
    _
  $region17: #{feed_forward_block.1} parent=0 // pred_fallthru
    _
  // Predicated region
  $region18: #{feed_forward_block.1} parent=0 // pred_check
    _
  $region19: #{feed_forward_block.1} parent=0 // pred_check_branch
    %19 = sbr.rel (0) target = $region21
  $region20: #{feed_forward_block.1} parent=0 // pred_region
    _
  $region21: #{feed_forward_block.1} parent=0 // pred_fallthru
    _
  %v20 = vld [vmem:[%s0] sm:$0xff]
  %v21 = vld [vmem:[%s0 + $0x8] sm:$0xff]
  %v22 = vld [vmem:[%s1] sm:$0xff]
  %v23 = vld [vmem:[%s1 + $0x8] sm:$0xff]
  %v24 = vld [vmem:[%s1 + $0x10] sm:$0xff]
  %v25 = vld [vmem:[%s1 + $0x18] sm:$0xff]
  %v26 = vld [vmem:[%s1 + $0x20] sm:$0xff]
  %v27 = vld [vmem:[%s1 + $0x28] sm:$0xff]
  %v28 = vld [vmem:[%s1 + $0x30] sm:$0xff]
  %v29 = vld [vmem:[%s1 + $0x38] sm:$0xff]
  %v30 = vld [vmem:[%s1 + $0x40] sm:$0xff]
  %v31 = vld [vmem:[%s1 + $0x48] sm:$0xff]
  %v32 = vld [vmem:[%s1 + $0x50] sm:$0xff]
  %v33 = vld [vmem:[%s1 + $0x58] sm:$0xff]
  %v34 = vld [vmem:[%s1 + $0x60] sm:$0xff]
  %v35 = vld [vmem:[%s1 + $0x68] sm:$0xff]
  %v36 = vld [vmem:[%s1 + $0x70] sm:$0xff]
  %v37 = vld [vmem:[%s1 + $0x78] sm:$0xff]
  %v38 = vld [vmem:[%s2] sm:$0x1]
  %v40 = vlaneseq
  %v41 = vshrl.u32 %v40, 7
  %v42 = vsub.s32 0, %v41
  %v43 = vrot.slane %v38, %v42
  %45 = vmatprep.subr.mxu0 0.0
  %46 = vmatpush1.msra.mxu0 %v22
  %47 = vmatprep.subr.mxu0 0.0
  %48 = vmatpush1.msra.mxu0 %v23
  %49 = vmatprep.subr.mxu0 0.0
  %50 = vmatpush1.msra.mxu0 %v24
  %51 = vmatprep.subr.mxu0 0.0
  %52 = vmatpush1.msra.mxu0 %v25
  %53 = vmatprep.subr.mxu0 0.0
  %54 = vmatpush1.msra.mxu0 %v26
  %55 = vmatprep.subr.mxu0 0.0
  %56 = vmatpush1.msra.mxu0 %v27
  %57 = vmatprep.subr.mxu0 0.0
  %58 = vmatpush1.msra.mxu0 %v28
  %59 = vmatprep.subr.mxu0 0.0
  %60 = vmatpush1.msra.mxu0 %v29
  %61 = vmatprep.subr.mxu0 0.0
  %62 = vmatpush1.msra.mxu0 %v30
  %63 = vmatprep.subr.mxu0 0.0
  %64 = vmatpush1.msra.mxu0 %v31
  %65 = vmatprep.subr.mxu0 0.0
  %66 = vmatpush1.msra.mxu0 %v32
  %67 = vmatprep.subr.mxu0 0.0
  %68 = vmatpush1.msra.mxu0 %v33
  %69 = vmatprep.subr.mxu0 0.0
  %70 = vmatpush1.msra.mxu0 %v34
  %71 = vmatprep.subr.mxu0 0.0
  %72 = vmatpush1.msra.mxu0 %v35
  %73 = vmatprep.subr.mxu0 0.0
  %74 = vmatpush1.msra.mxu0 %v36
  %75 = vmatprep.subr.mxu0 0.0
  %76 = vmatpush1.msra.mxu0 %v37
  %77 = vmatprep.subr.mxu0 0.0
  %78 = vmatpush1.msra.mxu0 0.0
  %79 = vmatprep.subr.mxu0 0.0
  %80 = vmatpush1.msra.mxu0 0.0
  %81 = vmatprep.subr.mxu0 0.0
  %82 = vmatpush1.msra.mxu0 0.0
  %83 = vmatprep.subr.mxu0 0.0
  %84 = vmatpush1.msra.mxu0 0.0
  %85 = vmatprep.subr.mxu0 0.0
  %86 = vmatpush1.msra.mxu0 0.0
  %87 = vmatprep.subr.mxu0 0.0
  %88 = vmatpush1.msra.mxu0 0.0
  %89 = vmatprep.subr.mxu0 0.0
  %90 = vmatpush1.msra.mxu0 0.0
  %91 = vmatprep.subr.mxu0 0.0
  %92 = vmatpush1.msra.mxu0 0.0
  %93 = vmatprep.subr.mxu0 0.0
  %94 = vmatpush1.msra.mxu0 0.0
  %95 = vmatprep.subr.mxu0 0.0
  %96 = vmatpush1.msra.mxu0 0.0
  %97 = vmatprep.subr.mxu0 0.0
  %98 = vmatpush1.msra.mxu0 0.0
  %99 = vmatprep.subr.mxu0 0.0
  %100 = vmatpush1.msra.mxu0 0.0
  %101 = vmatprep.subr.mxu0 0.0
  %102 = vmatpush1.msra.mxu0 0.0
  %103 = vmatprep.subr.mxu0 0.0
  %104 = vmatpush1.msra.mxu0 0.0
  %105 = vmatprep.subr.mxu0 0.0
  %106 = vmatpush1.msra.mxu0 0.0
  %107 = vmatprep.subr.mxu0 0.0
  %108 = vmatpush1.msra.mxu0 0.0
  %109 = vmatprep.mubr.f32.mxu0 0.0
  %110 = vmatmul.mubr.f32.gmra.mrb[0].mxu0 %v20
  %v111 = vpop.f32.mrb[0].mxu0
  %v112 = vadd.f32 %v43, %v111
  %v113 = vpop.f32.mrb[0].mxu0
  %114 = vmatprep.mubr.f32.mxu0 0.0
  %115 = vmatmul.mubr.f32.gmra.mrb[0].mxu0 %v21
  %v116 = vpop.f32.mrb[0].mxu0
  %v117 = vadd.f32 %v43, %v116
  %v118 = vpop.f32.mrb[0].mxu0
  %119 = vdwg.mxu0
  %v120 = vmax.f32 %v112, 0.0
  %v121 = vmax.f32 %v117, 0.0
  %v122 = vld [vmem:[%s3] sm:$0xff]
  %v123 = vld [vmem:[%s3 + $0x8] sm:$0xff]
  %v124 = vld [vmem:[%s3 + $0x10] sm:$0xff]
  %v125 = vld [vmem:[%s3 + $0x18] sm:$0xff]
  %v126 = vld [vmem:[%s3 + $0x20] sm:$0xff]
  %v127 = vld [vmem:[%s3 + $0x28] sm:$0xff]
  %v128 = vld [vmem:[%s3 + $0x30] sm:$0xff]
  %v129 = vld [vmem:[%s3 + $0x38] sm:$0xff]
  %v130 = vld [vmem:[%s3 + $0x40] sm:$0xff]
  %v131 = vld [vmem:[%s3 + $0x48] sm:$0xff]
  %v132 = vld [vmem:[%s3 + $0x50] sm:$0xff]
  %v133 = vld [vmem:[%s3 + $0x58] sm:$0xff]
  %v134 = vld [vmem:[%s3 + $0x60] sm:$0xff]
  %v135 = vld [vmem:[%s3 + $0x68] sm:$0xff]
  %v136 = vld [vmem:[%s3 + $0x70] sm:$0xff]
  %v137 = vld [vmem:[%s3 + $0x78] sm:$0xff]
  %v138 = vld [vmem:[%s4] sm:$0x1]
  %v140 = vlaneseq
  %v141 = vshrl.u32 %v140, 7
  %v142 = vsub.s32 0, %v141
  %v143 = vrot.slane %v138, %v142
  %145 = vmatprep.subr.mxu0 0.0
  %146 = vmatpush1.msra.mxu0 %v122
  %147 = vmatprep.subr.mxu0 0.0
  %148 = vmatpush1.msra.mxu0 %v123
  %149 = vmatprep.subr.mxu0 0.0
  %150 = vmatpush1.msra.mxu0 %v124
  %151 = vmatprep.subr.mxu0 0.0
  %152 = vmatpush1.msra.mxu0 %v125
  %153 = vmatprep.subr.mxu0 0.0
  %154 = vmatpush1.msra.mxu0 %v126
  %155 = vmatprep.subr.mxu0 0.0
  %156 = vmatpush1.msra.mxu0 %v127
  %157 = vmatprep.subr.mxu0 0.0
  %158 = vmatpush1.msra.mxu0 %v128
  %159 = vmatprep.subr.mxu0 0.0
  %160 = vmatpush1.msra.mxu0 %v129
  %161 = vmatprep.subr.mxu0 0.0
  %162 = vmatpush1.msra.mxu0 %v130
  %163 = vmatprep.subr.mxu0 0.0
  %164 = vmatpush1.msra.mxu0 %v131
  %165 = vmatprep.subr.mxu0 0.0
  %166 = vmatpush1.msra.mxu0 %v132
  %167 = vmatprep.subr.mxu0 0.0
  %168 = vmatpush1.msra.mxu0 %v133
  %169 = vmatprep.subr.mxu0 0.0
  %170 = vmatpush1.msra.mxu0 %v134
  %171 = vmatprep.subr.mxu0 0.0
  %172 = vmatpush1.msra.mxu0 %v135
  %173 = vmatprep.subr.mxu0 0.0
  %174 = vmatpush1.msra.mxu0 %v136
  %175 = vmatprep.subr.mxu0 0.0
  %176 = vmatpush1.msra.mxu0 %v137
  %177 = vmatprep.subr.mxu0 0.0
  %178 = vmatpush1.msra.mxu0 0.0
  %179 = vmatprep.subr.mxu0 0.0
  %180 = vmatpush1.msra.mxu0 0.0
  %181 = vmatprep.subr.mxu0 0.0
  %182 = vmatpush1.msra.mxu0 0.0
  %183 = vmatprep.subr.mxu0 0.0
  %184 = vmatpush1.msra.mxu0 0.0
  %185 = vmatprep.subr.mxu0 0.0
  %186 = vmatpush1.msra.mxu0 0.0
  %187 = vmatprep.subr.mxu0 0.0
  %188 = vmatpush1.msra.mxu0 0.0
  %189 = vmatprep.subr.mxu0 0.0
  %190 = vmatpush1.msra.mxu0 0.0
  %191 = vmatprep.subr.mxu0 0.0
  %192 = vmatpush1.msra.mxu0 0.0
  %193 = vmatprep.subr.mxu0 0.0
  %194 = vmatpush1.msra.mxu0 0.0
  %195 = vmatprep.subr.mxu0 0.0
  %196 = vmatpush1.msra.mxu0 0.0
  %197 = vmatprep.subr.mxu0 0.0
  %198 = vmatpush1.msra.mxu0 0.0
  %199 = vmatprep.subr.mxu0 0.0
  %200 = vmatpush1.msra.mxu0 0.0
  %201 = vmatprep.subr.mxu0 0.0
  %202 = vmatpush1.msra.mxu0 0.0
  %203 = vmatprep.subr.mxu0 0.0
  %204 = vmatpush1.msra.mxu0 0.0
  %205 = vmatprep.subr.mxu0 0.0
  %206 = vmatpush1.msra.mxu0 0.0
  %207 = vmatprep.subr.mxu0 0.0
  %208 = vmatpush1.msra.mxu0 0.0
  %209 = vmatprep.mubr.f32.mxu0 0.0
  %210 = vmatmul.mubr.f32.gmra.mrb[0].mxu0 %v120
  %v211 = vpop.f32.mrb[0].mxu0
  %v212 = vadd.f32 %v143, %v211
  %v213 = vpop.f32.mrb[0].mxu0
  %214 = vmatprep.mubr.f32.mxu0 0.0
  %215 = vmatmul.mubr.f32.gmra.mrb[0].mxu0 %v121
  %v216 = vpop.f32.mrb[0].mxu0
  %v217 = vadd.f32 %v143, %v216
  %v218 = vpop.f32.mrb[0].mxu0
  %219 = vdwg.mxu0
  %220 = vst [vmem:[%s5] sm:$0xff] %v212
  %221 = vst [vmem:[%s5 + $0x8] sm:$0xff] %v217
  // Predicated region
  $region22: #{feed_forward_block.1} parent=0 // pred_check
    _
  $region23: #{feed_forward_block.1} parent=0 // pred_check_branch
    %223 = sbr.rel (0) target = $region25
  $region24: #{feed_forward_block.1} parent=0 // pred_region
    _
  $region25: #{feed_forward_block.1} parent=0 // pred_fallthru
    _
  // Predicated region
  $region26: #{feed_forward_block.1} parent=0 // pred_check
    _
  $region27: #{feed_forward_block.1} parent=0 // pred_check_branch
    %225 = sbr.rel (0) target = $region29
  $region28: #{feed_forward_block.1} parent=0 // pred_region
    _
  $region29: #{feed_forward_block.1} parent=0 // pred_fallthru
    _

</llo_original>
